<compile_context>
chip_gen: v6e
topology: v6e:2x2x1
jax: 0.10.0
libtpu: 0.0.40
codegen_flags: <defaults>
</compile_context>

<pallas_src>
import jax
import jax.numpy as jnp
from jax.experimental import pallas as pl
from jax.experimental.pallas import tpu as pltpu

LANES = 128
MAX_TILE_ROWS = 2048  # 2048 x 128 x f32 = 1 MiB per tile buffer


def _round_up(x, m):
    return ((x + m - 1) // m) * m


def _reduce_sum_kernel(xh_ref, xc_ref, acc_ref):
    """Accumulate sum(x_cnn - x_hgcn) in f32 into a resident (1, 128) partial."""
    @pl.when(pl.program_id(0) == 0)
    def _():
        acc_ref[...] = jnp.zeros_like(acc_ref)

    diff = xc_ref[...].astype(jnp.float32) - xh_ref[...].astype(jnp.float32)
    acc_ref[...] += jnp.sum(diff, axis=0, keepdims=True)


def _mix_kernel(w_ref, xh_ref, xc_ref, hgcn_mix_ref, cnn_mix_ref):
    """Elementwise mix in the native input dtype (bf16 stays bf16 on v6e/v7x)."""
    xh = xh_ref[...]
    xc = xc_ref[...]
    w1 = w_ref[0].astype(xh.dtype)  # excitation_weight   (scales x_cnn)
    w2 = w_ref[1].astype(xh.dtype)  # excitation_weight2  (scales x_hgcn)
    # x_cnn_mix  = x_hgcn * w2 + x_cnn
    cnn_mix_ref[...] = xh * w2 + xc
    # x_hgcn_mix = x_hgcn + x_cnn * w1
    hgcn_mix_ref[...] = xh + xc * w1


def dfef_forward(x_hgcn, x_cnn):
    assert x_hgcn.shape == x_cnn.shape and x_hgcn.dtype == x_cnn.dtype
    orig_shape = x_hgcn.shape
    dtype = x_hgcn.dtype
    itemsize = jnp.dtype(dtype).itemsize

    total = 1
    for s in orig_shape:
        total *= s

    # Lane-dense padded slab (rows_padded, 128).  Zero padding is exact for the
    # global sum; the padded tail of the outputs is sliced off afterwards.
    rows = pl.cdiv(total, LANES)
    tile_rows = min(MAX_TILE_ROWS, _round_up(rows, 8))
    rows_padded = _round_up(rows, tile_rows)
    padded_total = rows_padded * LANES
    num_blocks = rows_padded // tile_rows

    flat_h = x_hgcn.reshape(-1)
    flat_c = x_cnn.reshape(-1)
    pad = padded_total - total
    if pad:
        flat_h = jnp.pad(flat_h, (0, pad))
        flat_c = jnp.pad(flat_c, (0, pad))
    xh2 = flat_h.reshape(rows_padded, LANES)
    xc2 = flat_c.reshape(rows_padded, LANES)

    tile_bytes = tile_rows * LANES * itemsize
    # 2 in + 2 out, double buffered, plus slack; stay well under v7x's 64 MiB.
    vmem_limit = int(min(48 * 1024 * 1024, max(16 * 1024 * 1024, 12 * tile_bytes)))

    tile_spec = pl.BlockSpec((tile_rows, LANES), lambda i: (i, 0))

    # ---- Pass 1: tiled global reduction sum(x_cnn - x_hgcn) -> (1, 128) ----
    partial = pl.pallas_call(
        _reduce_sum_kernel,
        out_shape=jax.ShapeDtypeStruct((1, LANES), jnp.float32),
        grid=(num_blocks,),
        in_specs=[tile_spec, tile_spec],
        out_specs=pl.BlockSpec((1, LANES), lambda i: (0, 0)),
        compiler_params=pltpu.CompilerParams(
            dimension_semantics=("arbitrary",),
            vmem_limit_bytes=vmem_limit,
        ),
        cost_estimate=pl.CostEstimate(
            flops=2 * padded_total,
            transcendentals=0,
            bytes_accessed=2 * padded_total * itemsize + LANES * 4,
        ),
    )(xh2, xc2)

    # Tiny scalar epilogue (f32).  mean(x_hgcn - x_cnn) == -mean(x_cnn - x_hgcn)
    # exactly, and tanh is odd, so the second reduction is folded away.
    m = jnp.sum(partial) / jnp.float32(total)
    w1 = jnp.tanh(m)   # scales x_cnn
    w2 = -w1           # scales x_hgcn
    w = jnp.stack([w1, w2]).astype(jnp.float32)

    # ---- Pass 2: tiled elementwise mix; scalar weights live in SMEM --------
    out_struct = jax.ShapeDtypeStruct((rows_padded, LANES), dtype)
    hgcn_mix2, cnn_mix2 = pl.pallas_call(
        _mix_kernel,
        out_shape=(out_struct, out_struct),
        grid=(num_blocks,),
        in_specs=[
            pl.BlockSpec(memory_space=pltpu.MemorySpace.SMEM),  # w: (2,) f32 scalars
            tile_spec,
            tile_spec,
        ],
        out_specs=(tile_spec, tile_spec),
        compiler_params=pltpu.CompilerParams(
            dimension_semantics=("parallel",),
            vmem_limit_bytes=vmem_limit,
        ),
        cost_estimate=pl.CostEstimate(
            flops=4 * padded_total,
            transcendentals=0,
            bytes_accessed=4 * padded_total * itemsize,
        ),
    )(w, xh2, xc2)

    hgcn_mix = hgcn_mix2.reshape(-1)[:total].reshape(orig_shape)
    cnn_mix = cnn_mix2.reshape(-1)[:total].reshape(orig_shape)
    return hgcn_mix, cnn_mix


def init_unused_params(input_channels, dtype=jnp.float32):
    """Deterministic init of parameters declared in __init__ but unused in
    forward() (global_fc1, global_fc2, batch_normalzation)."""
    k = jax.random.PRNGKey(42)
    k1, k2, k3, k4 = jax.random.split(k, 4)
    bound = 1.0 / (input_channels ** 0.5)
    return {
        "global_fc1_w": jax.random.uniform(k1, (1, input_channels), dtype, -bound, bound),
        "global_fc1_b": jax.random.uniform(k2, (1,), dtype, -bound, bound),
        "global_fc2_w": jax.random.uniform(k3, (1, input_channels), dtype, -bound, bound),
        "global_fc2_b": jax.random.uniform(k4, (1,), dtype, -bound, bound),
        "bn_gamma": jnp.ones((input_channels,), dtype),
        "bn_beta": jnp.zeros((input_channels,), dtype),
        "bn_running_mean": jnp.zeros((input_channels,), dtype),
        "bn_running_var": jnp.ones((input_channels,), dtype),
    }


def dfef_reference(x_hgcn, x_cnn):
    """Pure-JAX reference mirroring the PyTorch forward."""
    w1 = jnp.tanh(jnp.mean(x_cnn - x_hgcn))
    w2 = jnp.tanh(jnp.mean(x_hgcn - x_cnn))
    x_cnn_weight = x_cnn * w1
    x_hgcn_weight = x_hgcn * w2
    x_cnn_mix = x_hgcn_weight + x_cnn
    x_hgcn_mix = x_hgcn + x_cnn_weight
    return x_hgcn_mix, x_cnn_mix


if __name__ == "__main__":
    B, C, H, W = 2, 4, 16, 16  # NCHW, matching the PyTorch conv-feature layout
    key = jax.random.PRNGKey(0)
    k1, k2 = jax.random.split(key)
    x_hgcn = jax.random.normal(k1, (B, C, H, W), jnp.float32)
    x_cnn = jax.random.normal(k2, (B, C, H, W), jnp.float32)

    _ = init_unused_params(C)  # declared-but-unused params (fc1/fc2/BN)

    hgcn_mix, cnn_mix = dfef_forward(x_hgcn, x_cnn)
    jax.block_until_ready((hgcn_mix, cnn_mix))

    ref_hgcn, ref_cnn = dfef_reference(x_hgcn, x_cnn)
    assert jnp.allclose(hgcn_mix, ref_hgcn, atol=1e-5, rtol=1e-5)
    assert jnp.allclose(cnn_mix, ref_cnn, atol=1e-5, rtol=1e-5)

    print("KERNEL_OK")
</pallas_src>

<mosaic_0001>
module attributes {stable_mosaic.version = 11 : i64} {
  func.func @_reduce_sum_kernel(%arg0: i32, %arg1: memref<16x128xf32, #tpu.memory_space<vmem>>, %arg2: memref<16x128xf32, #tpu.memory_space<vmem>>, %arg3: memref<1x128xf32, #tpu.memory_space<vmem>>) attributes {dimension_semantics = [#tpu.dimension_semantics<arbitrary>], iteration_bounds = array<i64: 1>, scalar_prefetch = 0 : i64, scratch_operands = 0 : i64, tpu.core_type = #tpu.core_type<tc>, window_params = [{transform_indices = @transform_0, window_bounds = array<i64: 16, 128>}, {transform_indices = @transform_1, window_bounds = array<i64: 16, 128>}, {pipeline_mode = #tpu.pipeline_mode<synchronous>, transform_indices = @transform_2, window_bounds = array<i64: 1, 128>}]} {
    %c0_i32 = arith.constant 0 : i32
    %0 = arith.cmpi eq, %arg0, %c0_i32 : i32
    %1 = arith.extui %0 : i1 to i32
    %c0_i32_0 = arith.constant 0 : i32
    %2 = arith.cmpi ne, %1, %c0_i32_0 : i32
    scf.if %2 {
      %cst_8 = arith.constant 0.000000e+00 : f32
      %11 = vector.broadcast %cst_8 : f32 to vector<1x128xf32>
      %c0_9 = arith.constant 0 : index
      %c0_10 = arith.constant 0 : index
      %12 = vector.load %arg3[%c0_9, %c0_10] : memref<1x128xf32, #tpu.memory_space<vmem>>, vector<1x128xf32>
      tpu.vector_store %arg3[%c0_9, %c0_10], %11 {strides = array<i32>} : memref<1x128xf32, #tpu.memory_space<vmem>>, vector<1x128xf32>,
    } else {
    }
    %c0 = arith.constant 0 : index
    %c0_1 = arith.constant 0 : index
    %3 = vector.load %arg2[%c0, %c0_1] : memref<16x128xf32, #tpu.memory_space<vmem>>, vector<16x128xf32>
    %c0_2 = arith.constant 0 : index
    %c0_3 = arith.constant 0 : index
    %4 = vector.load %arg1[%c0_2, %c0_3] : memref<16x128xf32, #tpu.memory_space<vmem>>, vector<16x128xf32>
    %5 = arith.subf %3, %4 : vector<16x128xf32>
    %c0_4 = arith.constant 0 : index
    %c0_5 = arith.constant 0 : index
    %6 = vector.load %arg3[%c0_4, %c0_5] : memref<1x128xf32, #tpu.memory_space<vmem>>, vector<1x128xf32>
    %cst = arith.constant dense<0.000000e+00> : vector<128xf32>
    %7 = vector.multi_reduction <add>, %5, %cst [0] : vector<16x128xf32> to vector<128xf32>
    %8 = vector.shape_cast %7 : vector<128xf32> to vector<1x128xf32>
    %9 = arith.addf %6, %8 : vector<1x128xf32>
    %c0_6 = arith.constant 0 : index
    %c0_7 = arith.constant 0 : index
    %10 = vector.load %arg3[%c0_6, %c0_7] : memref<1x128xf32, #tpu.memory_space<vmem>>, vector<1x128xf32>
    tpu.vector_store %arg3[%c0_6, %c0_7], %9 {strides = array<i32>} : memref<1x128xf32, #tpu.memory_space<vmem>>, vector<1x128xf32>,
    return
  }
  func.func @transform_0(%arg0: i32) -> (i32, i32) {
    %c0_i32 = arith.constant 0 : i32
    %c0_i32_0 = arith.constant 0 : i32
    return %arg0, %c0_i32 : i32, i32
  }
  func.func @transform_1(%arg0: i32) -> (i32, i32) {
    %c0_i32 = arith.constant 0 : i32
    %c0_i32_0 = arith.constant 0 : i32
    return %arg0, %c0_i32 : i32, i32
  }
  func.func @transform_2(%arg0: i32) -> (i32, i32) {
    %c0_i32 = arith.constant 0 : i32
    %c0_i32_0 = arith.constant 0 : i32
    %c0_i32_1 = arith.constant 0 : i32
    return %c0_i32, %c0_i32_0 : i32, i32
  }
}

</mosaic_0001>

<llo_original>
// kernel: tpu_custom_call.1
$region0: #{tpu_custom_call.1}
  #allocation0 [shape = 'u32[]', space=smem, size = 0x4, offset = 0x4, fixed_abs, tag = 'smem constant byte address 0x4 - core index']
  #allocation1 [shape = 'u32[144,128]{1,0:T(1,128)}', space=vmem, size = 0x12000, scoped, tag = 'internal scratch']
  %s0 = inlined_call_operand.hbm [shape: f32[16,128], index: 0, kind: input, shape index: {}]
  %s1 = inlined_call_operand.hbm [shape: f32[16,128], index: 1, kind: input, shape index: {}]
  %s2 = inlined_call_operand.hbm [shape: f32[1,128], index: 2, kind: output, shape index: {}]
  %s3 = sld [smem:[#allocation0]]
  $region30: #{tpu_custom_call.1} parent=0
    _
  %s5 = ssub.s32 1, %s3
  %s6 = scalar_select 0, %s5, %s3
  $region1: #{tpu_custom_call.1} parent=0
    #allocation2 [shape = 'u8[8192]{0}', space=vmem, size = 0x2000, scoped, tag = 'input window, operand 0, single buffered']
    #allocation3 [shape = 's32[1]{0}', space=sflag, size = 0x4, scoped, tag = 'scoped memory for tpu_custom_call.1']
    #allocation4 [shape = 's32[1]{0}', space=sflag, size = 0x4, scoped, tag = 'scoped memory for tpu_custom_call.1']
    #allocation5 [shape = 'u8[8192]{0}', space=vmem, size = 0x2000, scoped, tag = 'input window, operand 1, single buffered']
    #allocation6 [shape = 's32[1]{0}', space=sflag, size = 0x4, scoped, tag = 'scoped memory for tpu_custom_call.1']
    #allocation7 [shape = 'u8[512]{0}', space=vmem, size = 0x400, scoped, tag = 'output window, operand 0, single buffered']
    %7 = vsyncpa [#allocation3], 0
    %8 = vsyncpa [#allocation6], 0
    %9 = vsyncpa [#allocation4], 0
    // Predicated region
    $region2: #{tpu_custom_call.1} parent=1 // pred_check
      _
    $region3: #{tpu_custom_call.1} parent=1 // pred_check_branch
      %11 = sbr.rel (0) target = $region5
    $region4: #{tpu_custom_call.1} parent=1 // pred_region
      %s13 = ssub.s32 256, 256
      %14 = vsyncadd [#allocation3], %s13
      %s15 = sshll.u32 [#allocation2], 4
      %s16 = int_to_ptr.vmem [resolvable:$true] %s15
      %21 = dma.hbm_to_vmem [thread:$0]  %s0, 256, %s16, [#allocation3], 128, 128, 8
    $region5: #{tpu_custom_call.1} parent=1 // pred_fallthru
      _
    // Predicated region
    $region6: #{tpu_custom_call.1} parent=1 // pred_check
      _
    $region7: #{tpu_custom_call.1} parent=1 // pred_check_branch
      %23 = sbr.rel (0) target = $region9
    $region8: #{tpu_custom_call.1} parent=1 // pred_region
      %s25 = ssub.s32 256, 256
      %26 = vsyncadd [#allocation6], %s25
      %s27 = sshll.u32 [#allocation5], 4
      %s28 = int_to_ptr.vmem [resolvable:$true] %s27
      %33 = dma.hbm_to_vmem [thread:$0]  %s1, 256, %s28, [#allocation6], 128, 128, 8
    $region9: #{tpu_custom_call.1} parent=1 // pred_fallthru
      _
    // Predicated region
    $region10: #{tpu_custom_call.1} parent=1 // pred_check
      _
    $region11: #{tpu_custom_call.1} parent=1 // pred_check_branch
      %35 = sbr.rel (0) target = $region13
    $region12: #{tpu_custom_call.1} parent=1 // pred_region
      %36 = dma.done [#allocation3], 256
    $region13: #{tpu_custom_call.1} parent=1 // pred_fallthru
      _
    // Predicated region
    $region14: #{tpu_custom_call.1} parent=1 // pred_check
      _
    $region15: #{tpu_custom_call.1} parent=1 // pred_check_branch
      %38 = sbr.rel (0) target = $region17
    $region16: #{tpu_custom_call.1} parent=1 // pred_region
      %39 = dma.done [#allocation6], 256
    $region17: #{tpu_custom_call.1} parent=1 // pred_fallthru
      _
    %p40 = scmp.eq.s32.totalorder 0, 0
    // Predicated region
    $region18: #{tpu_custom_call.1} parent=1 // pred_check
      %p41 = pneg %p40
    $region19: #{tpu_custom_call.1} parent=1 // pred_check_branch
      %43 = sbr.rel (%p41) target = $region21
    $region20: #{tpu_custom_call.1} parent=1 // pred_region
      %44 = vst [vmem:[#allocation7] sm:$0x1] 0.0
    $region21: #{tpu_custom_call.1} parent=1 // pred_fallthru
      _
    %v45 = vld [vmem:[#allocation5] sm:$0xff]
    %v46 = vld [vmem:[#allocation5 + $0x8] sm:$0xff]
    %v47 = vld [vmem:[#allocation2] sm:$0xff]
    %v48 = vld [vmem:[#allocation2 + $0x8] sm:$0xff]
    %v49 = vsub.f32 %v45, %v47
    %v50 = vsub.f32 %v46, %v48
    %v51 = vld [vmem:[#allocation7] sm:$0x1]
    %v52 = vadd.f32 %v49, %v50
    %v53 = vrot.slane %v52, 4
    %v54 = vadd.f32 %v52, %v53
    %v55 = vrot.slane %v54, 2
    %v56 = vadd.f32 %v54, %v55
    %v57 = vrot.slane %v56, 1
    %v58 = vadd.f32 %v56, %v57
    %v59 = vadd.f32 %v51, %v58
    %60 = vst [vmem:[#allocation7] sm:$0x1] %v59
    // Predicated region
    $region22: #{tpu_custom_call.1} parent=1 // pred_check
      _
    $region23: #{tpu_custom_call.1} parent=1 // pred_check_branch
      %62 = sbr.rel (0) target = $region25
    $region24: #{tpu_custom_call.1} parent=1 // pred_region
      %s64 = ssub.s32 16, 16
      %65 = vsyncadd [#allocation4], %s64
      %s67 = sshll.u32 [#allocation7], 4
      %s68 = int_to_ptr.vmem [resolvable:$true] %s67
      %70 = dma.vmem_to_hbm [thread:$0]  %s68, 16, %s2, [#allocation4]
    $region25: #{tpu_custom_call.1} parent=1 // pred_fallthru
      _
    // Predicated region
    $region26: #{tpu_custom_call.1} parent=1 // pred_check
      _
    $region27: #{tpu_custom_call.1} parent=1 // pred_check_branch
      %72 = sbr.rel (0) target = $region29
    $region28: #{tpu_custom_call.1} parent=1 // pred_region
      %73 = dma.done [#allocation4], 16
    $region29: #{tpu_custom_call.1} parent=1 // pred_fallthru
      _
    %74 = vsyncpa [#allocation3], 1
    %75 = vsyncpa [#allocation6], 1
    %76 = vsyncpa [#allocation4], 1

</llo_original>
